<compile_context>
chip_gen: v7x
topology: tpu7x:2x2x1
jax: 0.10.0
libtpu: 0.0.40
codegen_flags: <defaults>
</compile_context>

<pallas_src>
import jax
import jax.numpy as jnp
from jax.experimental import pallas as pl
from jax.experimental.pallas import tpu as pltpu


def linear_mixer_kernel(w_ref, b_ref, x_ref, o_ref):
    """One lane-tile of the fused token-mixing stack.

    w_ref: (depth, T, T)  bf16, causal mask (tril) already applied
    b_ref: (depth, T, 1)  f32 Conv1d biases
    x_ref: (T, tn)        f32 activation slab tile (tokens x (batch*feature))
    o_ref: (T, tn)        f32 output tile
    """
    depth = w_ref.shape[0]

    x = x_ref[...]                                            # (T, tn) f32

    # depth is small and static -> unrolled Python loop (static ref indices).
    for l in range(depth):
        # MXU matmul in bf16 with f32 accumulation; residual/bias stay f32.
        y = jnp.dot(w_ref[l], x.astype(jnp.bfloat16),
                    preferred_element_type=jnp.float32)       # (T, tn)
        x = y + b_ref[l] + x                                  # bias (T,1) broadcasts

    o_ref[...] = jnp.maximum(x, 0.0)                          # final ReLU


def _pick_lane_tile(n):
    """Lane-tile size for the B*D axis: lane-dense (multiple of 128), preferring
    >=2 tiles so both v7x TensorCores get work; fall back to full extent."""
    for tn in (512, 256, 128):
        if n % tn == 0 and n // tn >= 2:
            return tn
    for tn in (1024, 512, 256, 128):
        if n % tn == 0:
            return tn
    return n  # block == full array dim is always legal


def linear_mixer_forward(input_ids, wte, conv_w, conv_b):
    """input_ids: (B, T) int32; wte: (V, D); conv_w: (depth, T, T); conv_b: (depth, T)."""
    B, T = input_ids.shape
    depth = conv_w.shape[0]
    D = wte.shape[1]
    N = B * D

    # Causal mask applied once outside the kernel; stream W as bf16.
    w = jnp.tril(conv_w).astype(jnp.bfloat16)                  # (depth, T, T)
    bias = conv_b.reshape(depth, T, 1).astype(jnp.float32)     # (depth, T, 1)

    # Embedding lookup stays in XLA (gather).
    # TODO(synk): fuse the wte gather into the kernel (scalar-prefetch ids +
    # pl.Element row gather) to avoid the extra HBM round-trip of x.
    x = jnp.take(wte, input_ids, axis=0).astype(jnp.float32)   # (B, T, D)

    # Lane-dense slab: tokens on the sublane/contraction axis, (batch, feature)
    # fused on the lane axis. W is batch-invariant, so y = W @ x_slab per layer.
    x_slab = jnp.transpose(x, (1, 0, 2)).reshape(T, N)         # (T, B*D)

    tn = _pick_lane_tile(N)
    grid = (N // tn,)

    flops = 2 * depth * T * T * N
    bytes_accessed = int(w.size * 2 + bias.size * 4 + 2 * x_slab.size * 4)

    # TODO(synk): for much larger T/depth, tile W along the contraction axis
    # (extra "arbitrary" grid dim + VMEM accumulator) to stay under v7x's
    # 64 MiB VMEM; at T=128/depth=2 the full weight block is only ~64 KiB.
    out_slab = pl.pallas_call(
        linear_mixer_kernel,
        out_shape=jax.ShapeDtypeStruct((T, N), jnp.float32),
        grid_spec=pltpu.PrefetchScalarGridSpec(
            num_scalar_prefetch=0,
            grid=grid,
            in_specs=[
                # Constant index maps -> W / bias fetched once, held resident.
                pl.BlockSpec((depth, T, T), lambda j: (0, 0, 0)),
                pl.BlockSpec((depth, T, 1), lambda j: (0, 0, 0)),
                pl.BlockSpec((T, tn), lambda j: (0, j)),
            ],
            out_specs=pl.BlockSpec((T, tn), lambda j: (0, j)),
        ),
        compiler_params=pltpu.CompilerParams(
            dimension_semantics=("parallel",),
            vmem_limit_bytes=32 * 1024 * 1024,
        ),
        cost_estimate=pl.CostEstimate(
            flops=flops, transcendentals=0, bytes_accessed=bytes_accessed),
    )(w, bias, x_slab)

    # Back to (B, T, D).
    return jnp.transpose(out_slab.reshape(T, B, D), (1, 0, 2))


def linear_mixer_reference(input_ids, wte, conv_w, conv_b):
    """Pure-JAX (f32) reference of the same forward pass."""
    x = jnp.take(wte, input_ids, axis=0).astype(jnp.float32)    # (B, T, D)
    depth, T, _ = conv_w.shape
    for l in range(depth):
        w = jnp.tril(conv_w[l])
        x = jnp.einsum("ij,bjd->bid", w, x) + conv_b[l][None, :, None] + x
    return jnp.maximum(x, 0.0)


if __name__ == "__main__":
    # Small, deterministic synthetic configuration consistent with the module:
    # tokenized_length is hard-coded to 128 in the original file.
    B = 4           # batch
    T = 128         # tokenized_length (sequence / Conv1d channels)
    D = 64          # embedding dim
    V = 512         # synthetic vocab size
    DEPTH = 2       # number of LinearBlocks

    key = jax.random.PRNGKey(0)
    k_ids, k_wte, k_w, k_b = jax.random.split(key, 4)

    input_ids = jax.random.randint(k_ids, (B, T), 0, V, dtype=jnp.int32)
    wte = 0.02 * jax.random.normal(k_wte, (V, D), dtype=jnp.float32)
    # nn.Conv1d(length, length, 1).weight has shape (T, T, 1); kernel dim squeezed here.
    conv_w = (1.0 / T) * jax.random.normal(k_w, (DEPTH, T, T), dtype=jnp.float32)
    conv_b = 0.01 * jax.random.normal(k_b, (DEPTH, T), dtype=jnp.float32)

    out = linear_mixer_forward(input_ids, wte, conv_w, conv_b)
    out = jax.block_until_ready(out)

    ref = linear_mixer_reference(input_ids, wte, conv_w, conv_b)
    assert out.shape == (B, T, D)
    # bf16 MXU operands (f32 accumulation) -> slightly relaxed tolerance vs f32 ref.
    assert jnp.allclose(out, ref, atol=1e-3, rtol=1e-2), "mismatch vs reference"

    # TODO(synk): the labels!=None branch (lm_head + shifted cross-entropy loss)
    # is not exercised here; only the labels=None forward (returned activations).
    print("KERNEL_OK")
</pallas_src>

<mosaic_0001>
module attributes {stable_mosaic.version = 11 : i64} {
  func.func @linear_mixer_kernel(%arg0: i32, %arg1: memref<2x128x128xbf16, #tpu.memory_space<vmem>>, %arg2: memref<2x128x1xf32, #tpu.memory_space<vmem>>, %arg3: memref<128x128xf32, #tpu.memory_space<vmem>>, %arg4: memref<128x128xf32, #tpu.memory_space<vmem>>) attributes {dimension_semantics = [#tpu.dimension_semantics<parallel>], iteration_bounds = array<i64: 2>, scalar_prefetch = 0 : i64, scratch_operands = 0 : i64, tpu.core_type = #tpu.core_type<tc>, window_params = [{pipeline_mode = #tpu.pipeline_mode<synchronous>, transform_indices = @transform_0, window_bounds = array<i64: 2, 128, 128>}, {pipeline_mode = #tpu.pipeline_mode<synchronous>, transform_indices = @transform_1, window_bounds = array<i64: 2, 128, 1>}, {transform_indices = @transform_2, window_bounds = array<i64: 128, 128>}, {transform_indices = @transform_3, window_bounds = array<i64: 128, 128>}]} {
    %c0 = arith.constant 0 : index
    %c0_0 = arith.constant 0 : index
    %0 = vector.load %arg3[%c0, %c0_0] : memref<128x128xf32, #tpu.memory_space<vmem>>, vector<128x128xf32>
    %c0_1 = arith.constant 0 : index
    %c0_2 = arith.constant 0 : index
    %c0_3 = arith.constant 0 : index
    %1 = vector.load %arg1[%c0_1, %c0_2, %c0_3] : memref<2x128x128xbf16, #tpu.memory_space<vmem>>, vector<1x128x128xbf16>
    %2 = vector.shape_cast %1 : vector<1x128x128xbf16> to vector<128x128xbf16>
    %3 = arith.truncf %0 : vector<128x128xf32> to vector<128x128xbf16>
    %cst = arith.constant dense<0.000000e+00> : vector<128x128xf32>
    %4 = tpu.matmul %2, %3, %cst {dimension_numbers = #tpu.dot_dimension_numbers<[1], [0], [0], [1], [0, 0, 1, 1], [], []>} : vector<128x128xbf16>, vector<128x128xbf16>, vector<128x128xf32> -> vector<128x128xf32>
    %c0_4 = arith.constant 0 : index
    %c0_5 = arith.constant 0 : index
    %c0_6 = arith.constant 0 : index
    %5 = vector.load %arg2[%c0_4, %c0_5, %c0_6] : memref<2x128x1xf32, #tpu.memory_space<vmem>>, vector<1x128x1xf32>
    %6 = vector.shape_cast %5 : vector<1x128x1xf32> to vector<128x1xf32>
    %7 = vector.broadcast %6 : vector<128x1xf32> to vector<128x128xf32>
    %8 = arith.addf %4, %7 : vector<128x128xf32>
    %9 = arith.addf %8, %0 : vector<128x128xf32>
    %c1 = arith.constant 1 : index
    %c0_7 = arith.constant 0 : index
    %c0_8 = arith.constant 0 : index
    %10 = vector.load %arg1[%c1, %c0_7, %c0_8] : memref<2x128x128xbf16, #tpu.memory_space<vmem>>, vector<1x128x128xbf16>
    %11 = vector.shape_cast %10 : vector<1x128x128xbf16> to vector<128x128xbf16>
    %12 = arith.truncf %9 : vector<128x128xf32> to vector<128x128xbf16>
    %cst_9 = arith.constant dense<0.000000e+00> : vector<128x128xf32>
    %13 = tpu.matmul %11, %12, %cst_9 {dimension_numbers = #tpu.dot_dimension_numbers<[1], [0], [0], [1], [0, 0, 1, 1], [], []>} : vector<128x128xbf16>, vector<128x128xbf16>, vector<128x128xf32> -> vector<128x128xf32>
    %c1_10 = arith.constant 1 : index
    %c0_11 = arith.constant 0 : index
    %c0_12 = arith.constant 0 : index
    %14 = vector.load %arg2[%c1_10, %c0_11, %c0_12] : memref<2x128x1xf32, #tpu.memory_space<vmem>>, vector<1x128x1xf32>
    %15 = vector.shape_cast %14 : vector<1x128x1xf32> to vector<128x1xf32>
    %16 = vector.broadcast %15 : vector<128x1xf32> to vector<128x128xf32>
    %17 = arith.addf %13, %16 : vector<128x128xf32>
    %18 = arith.addf %17, %9 : vector<128x128xf32>
    %cst_13 = arith.constant 0.000000e+00 : f32
    %19 = vector.broadcast %cst_13 : f32 to vector<128x128xf32>
    %20 = arith.maximumf %18, %19 : vector<128x128xf32>
    %c0_14 = arith.constant 0 : index
    %c0_15 = arith.constant 0 : index
    %21 = vector.load %arg4[%c0_14, %c0_15] : memref<128x128xf32, #tpu.memory_space<vmem>>, vector<128x128xf32>
    tpu.vector_store %arg4[%c0_14, %c0_15], %20 {strides = array<i32>} : memref<128x128xf32, #tpu.memory_space<vmem>>, vector<128x128xf32>,
    return
  }
  func.func @transform_0(%arg0: i32) -> (i32, i32, i32) {
    %c0_i32 = arith.constant 0 : i32
    %c0_i32_0 = arith.constant 0 : i32
    %c0_i32_1 = arith.constant 0 : i32
    %c0_i32_2 = arith.constant 0 : i32
    return %c0_i32, %c0_i32_0, %c0_i32_1 : i32, i32, i32
  }
  func.func @transform_1(%arg0: i32) -> (i32, i32, i32) {
    %c0_i32 = arith.constant 0 : i32
    %c0_i32_0 = arith.constant 0 : i32
    %c0_i32_1 = arith.constant 0 : i32
    %c0_i32_2 = arith.constant 0 : i32
    return %c0_i32, %c0_i32_0, %c0_i32_1 : i32, i32, i32
  }
  func.func @transform_2(%arg0: i32) -> (i32, i32) {
    %c0_i32 = arith.constant 0 : i32
    %c0_i32_0 = arith.constant 0 : i32
    return %c0_i32, %arg0 : i32, i32
  }
  func.func @transform_3(%arg0: i32) -> (i32, i32) {
    %c0_i32 = arith.constant 0 : i32
    %c0_i32_0 = arith.constant 0 : i32
    return %c0_i32, %arg0 : i32, i32
  }
}

</mosaic_0001>

<llo_original>
// kernel: tpu_custom_call.1
$region0: #{tpu_custom_call.1}
  #allocation0 [shape = 'u32[]', space=smem, size = 0x4, offset = 0x4, fixed_abs, tag = 'smem constant byte address 0x4 - core index']
  #allocation1 [shape = 'u32[144,128]{1,0:T(1,128)}', space=vmem, size = 0x12000, scoped, tag = 'internal scratch']
  %s0 = inlined_call_operand.hbm [shape: bf16[2,128,128], index: 0, kind: input, shape index: {}]
  %s1 = inlined_call_operand.vmem [shape: f32[2,128,1], index: 1, kind: input, shape index: {}]
  %s2 = inlined_call_operand.vmem [shape: f32[128,256], index: 2, kind: input, shape index: {}]
  %s3 = inlined_call_operand.hbm [shape: f32[128,256], index: 3, kind: output, shape index: {}]
  %s4 = sld [smem:[#allocation0]]
  $region87: #{tpu_custom_call.1} parent=0
    _
  %s6 = ssub.s32 1, %s4
  %s7 = scalar_select 0, %s6, %s4
  $region1: #{tpu_custom_call.1} parent=0
    #allocation2 [shape = 'u8[65536]{0}', space=vmem, size = 0x10000, scoped, tag = 'input window, operand 0, single buffered']
    #allocation3 [shape = 's32[2]{0}', space=sflag, size = 0x8, scoped, tag = 'scoped memory for tpu_custom_call.1']
    #allocation4 [shape = 's32[2]{0}', space=sflag, size = 0x8, scoped, tag = 'scoped memory for tpu_custom_call.1']
    #allocation5 [shape = 'u8[131072]{0}', space=vmem, size = 0x20000, scoped, tag = 'input window, operand 2']
    #allocation6 [shape = 'u8[131072]{0}', space=vmem, size = 0x20000, scoped, tag = 'output window, operand 0']
    %8 = vsyncpa [#allocation3], 0
    %9 = vsyncpa [#allocation4], 0
    %s10 = scalar_lea.sflag [#allocation4], 1
    %11 = vsyncpa %s10, 0
    loop: start=0, step=1, limit=4
    $region2: #{tpu_custom_call.1} parent=1 // loop_pre_header
      _
    $region3: #{tpu_custom_call.1} parent=1 // loop_header
      %s13 = sphi 0, %s17
      %p14 = scmp.ge.s32.totalorder %s13, 4
      %s21 = sphi 0, %s21
      %s23 = sphi 0, %s21
      %s24 = sphi 0, %s23
      %s38 = sphi 0, %s24
      %s42 = sphi 0, %s42
      %s44 = sphi 0, %s42
      %s45 = sphi 0, %s44
      %s59 = sphi 0, %s45
      %s65 = sphi 0, %s67
      %s68 = sphi 0, %s65
      %s69 = sphi 0, %s68
      %s85 = sphi 0, %s69
      %s91 = sphi 0, %s93
      %s94 = sphi 0, %s91
      %s95 = sphi 0, %s94
      %s111 = sphi 0, %s95
    $region4: #{tpu_custom_call.1} parent=1 // loop_header_branch
      %16 = sbr.rel (%p14) target = $region8
    $region5: #{tpu_custom_call.1} parent=1 // loop_body
      %s18 = ssub.s32 %s13, 1
      %s19 = ssub.s32 %s13, 2
      %s20 = sadd.s32 %s13, 1
      %s22 = sadd.s32 %s21, 1
      %p25 = scmp.eq.s32.totalorder %s13, 1
      %p26 = scmp.ne.s32.totalorder %s21, %s23
      %p27 = scmp.eq.s32.totalorder %s13, 0
      %p28 = por %p26, %p27
      %p29 = scmp.ne.s32.totalorder %s21, %s23
      %p30 = scmp.eq.s32.totalorder %s18, 1
      %p31 = por %p29, %p30
      %p32 = scmp.ne.s32.totalorder %s23, %s24
      %p33 = scmp.eq.s32.totalorder %s18, 0
      %p34 = por %p32, %p33
      %p35 = scmp.ne.s32.totalorder %s23, %s24
      %p36 = scmp.eq.s32.totalorder %s19, 1
      %p37 = por %p35, %p36
      %p39 = scmp.ne.s32.totalorder %s24, %s38
      %p40 = scmp.eq.s32.totalorder %s19, 0
      %p41 = por %p39, %p40
      %s43 = sadd.s32 %s42, 1
      %p46 = scmp.eq.s32.totalorder %s13, 1
      %p47 = scmp.ne.s32.totalorder %s42, %s44
      %p48 = scmp.eq.s32.totalorder %s13, 0
      %p49 = por %p47, %p48
      %p50 = scmp.ne.s32.totalorder %s42, %s44
      %p51 = scmp.eq.s32.totalorder %s18, 1
      %p52 = por %p50, %p51
      %p53 = scmp.ne.s32.totalorder %s44, %s45
      %p54 = scmp.eq.s32.totalorder %s18, 0
      %p55 = por %p53, %p54
      %p56 = scmp.ne.s32.totalorder %s44, %s45
      %p57 = scmp.eq.s32.totalorder %s19, 1
      %p58 = por %p56, %p57
      %p60 = scmp.ne.s32.totalorder %s45, %s59
      %p61 = scmp.eq.s32.totalorder %s19, 0
      %p62 = por %p60, %p61
      %s63 = ssub.s32 %s13, %s20
      %p64 = scmp.eq.s32.totalorder %s63, 0
      %s66 = sadd.s32 %s65, 1
      %s67 = scalar_select %p64, %s65, %s66
      %p70 = pneg %p64
      %p71 = scmp.eq.s32.totalorder %s13, 1
      %p72 = por %p70, %p71
      %p73 = scmp.ne.s32.totalorder %s65, %s68
      %p74 = scmp.eq.s32.totalorder %s13, 0
      %p75 = por %p73, %p74
      %p76 = scmp.ne.s32.totalorder %s65, %s68
      %p77 = scmp.eq.s32.totalorder %s18, 1
      %p78 = por %p76, %p77
      %p79 = scmp.ne.s32.totalorder %s68, %s69
      %p80 = scmp.eq.s32.totalorder %s18, 0
      %p81 = por %p79, %p80
      %p82 = scmp.ne.s32.totalorder %s68, %s69
      %p83 = scmp.eq.s32.totalorder %s19, 1
      %p84 = por %p82, %p83
      %p86 = scmp.ne.s32.totalorder %s69, %s85
      %p87 = scmp.eq.s32.totalorder %s19, 0
      %p88 = por %p86, %p87
      %s89 = ssub.s32 %s13, %s20
      %p90 = scmp.eq.s32.totalorder %s89, 0
      %s92 = sadd.s32 %s91, 1
      %s93 = scalar_select %p90, %s91, %s92
      %p96 = pneg %p90
      %p97 = scmp.eq.s32.totalorder %s13, 1
      %p98 = por %p96, %p97
      %p99 = scmp.ne.s32.totalorder %s91, %s94
      %p100 = scmp.eq.s32.totalorder %s13, 0
      %p101 = por %p99, %p100
      %p102 = scmp.ne.s32.totalorder %s91, %s94
      %p103 = scmp.eq.s32.totalorder %s18, 1
      %p104 = por %p102, %p103
      %p105 = scmp.ne.s32.totalorder %s94, %s95
      %p106 = scmp.eq.s32.totalorder %s18, 0
      %p107 = por %p105, %p106
      %p108 = scmp.ne.s32.totalorder %s94, %s95
      %p109 = scmp.eq.s32.totalorder %s19, 1
      %p110 = por %p108, %p109
      %p112 = scmp.ne.s32.totalorder %s95, %s111
      %p113 = scmp.eq.s32.totalorder %s19, 0
      %p114 = por %p112, %p113
      %p115 = scmp.le.s32.totalorder 1, %s13
      %p116 = scmp.lt.s32.totalorder %s13, 3
      %p117 = pnand %p115, %p116
      %p118 = pneg %p117
      // Predicated region
      $region9: #{tpu_custom_call.1} parent=5 // pred_check
        _
      $region10: #{tpu_custom_call.1} parent=5 // pred_check_branch
        %120 = sbr.rel (%p117) target = $region12
      $region11: #{tpu_custom_call.1} parent=5 // pred_region
        %s121 = ssub.s32 %s13, 1
        // Predicated region
        $region13: #{tpu_custom_call.1} parent=11 // pred_check
          %p122 = pneg %p34
        $region14: #{tpu_custom_call.1} parent=11 // pred_check_branch
          %124 = sbr.rel (%p122) target = $region16
        $region15: #{tpu_custom_call.1} parent=11 // pred_region
          %s126 = ssub.s32 2048, 2048
          %127 = vsyncadd [#allocation3], %s126
          %s128 = sshll.u32 [#allocation2], 4
          %s129 = int_to_ptr.vmem [resolvable:$true] %s128
          %134 = dma.hbm_to_vmem [thread:$0]  %s0, 2048, %s129, [#allocation3], 64, 64, 4
        $region16: #{tpu_custom_call.1} parent=11 // pred_fallthru
          _
        // Predicated region
        $region17: #{tpu_custom_call.1} parent=11 // pred_check
          %p135 = pneg %p55
        $region18: #{tpu_custom_call.1} parent=11 // pred_check_branch
          %137 = sbr.rel (%p135) target = $region20
        $region19: #{tpu_custom_call.1} parent=11 // pred_region
          _
        $region20: #{tpu_custom_call.1} parent=11 // pred_fallthru
          _
      $region12: #{tpu_custom_call.1} parent=5 // pred_fallthru
        _
      %p138 = scmp.lt.s32.totalorder %s13, 2
      // Predicated region
      $region21: #{tpu_custom_call.1} parent=5 // pred_check
        %p139 = pneg %p138
      $region22: #{tpu_custom_call.1} parent=5 // pred_check_branch
        %141 = sbr.rel (%p139) target = $region24
      $region23: #{tpu_custom_call.1} parent=5 // pred_region
        // Predicated region
        $region25: #{tpu_custom_call.1} parent=23 // pred_check
          %p142 = pneg %p75
        $region26: #{tpu_custom_call.1} parent=23 // pred_check_branch
          %144 = sbr.rel (%p142) target = $region28
        $region27: #{tpu_custom_call.1} parent=23 // pred_region
          %s145 = sand.u32 %s65, 1
          %s146 = sand.u32 %s65, 1
          %s147 = smul.addr %s146, 128
          %s148 = scalar_lea.vmem [#allocation5], %s147
          %s149 = smul.addr %s13, 8
          %s150 = scalar_lea.vmem %s2, %s149
          // Predicated region
          $region29: #{tpu_custom_call.1} parent=27 // pred_check
            _
          $region30: #{tpu_custom_call.1} parent=27 // pred_check_branch
            %152 = sbr.rel (0) target = $region32
          $region31: #{tpu_custom_call.1} parent=27 // pred_region
            // Predicated region
            $region33: #{tpu_custom_call.1} parent=31 // pred_check
              _
            $region34: #{tpu_custom_call.1} parent=31 // pred_check_branch
              %154 = sbr.rel (0) target = $region36
            $region35: #{tpu_custom_call.1} parent=31 // pred_region
              // Predicated region
              $region48: #{tpu_custom_call.1} parent=35 // pred_check
                _
              $region49: #{tpu_custom_call.1} parent=35 // pred_check_branch
                %199 = sbr.rel (0) target = $region51
              $region50: #{tpu_custom_call.1} parent=35 // pred_region
                loop: start=0, step=1, limit=1
                $region52: #{tpu_custom_call.1} parent=50 // loop_pre_header
                  _
                $region53: #{tpu_custom_call.1} parent=50 // loop_header
                  %s201 = sphi 0, %s205
                  %p202 = scmp.ge.s32.totalorder %s201, 1
                  %s206 = sphi %s150, %s150
                  %s207 = sphi %s148, %s148
                $region54: #{tpu_custom_call.1} parent=50 // loop_header_branch
                  %204 = sbr.rel (%p202) target = $region58
                $region55: #{tpu_custom_call.1} parent=50 // loop_body
                  %v208 = vld [vmem:[%s206] sm:$0xff]
                  %209 = vst [vmem:[%s207] sm:$0xff] %v208
                  %v210 = vld [vmem:[%s206 + $0x10] sm:$0xff]
                  %211 = vst [vmem:[%s207 + $0x8] sm:$0xff] %v210
                  %v212 = vld [vmem:[%s206 + $0x20] sm:$0xff]
                  %213 = vst [vmem:[%s207 + $0x10] sm:$0xff] %v212
                  %v214 = vld [vmem:[%s206 + $0x30] sm:$0xff]
                  %215 = vst [vmem:[%s207 + $0x18] sm:$0xff] %v214
                  %v216 = vld [vmem:[%s206 + $0x40] sm:$0xff]
                  %217 = vst [vmem:[%s207 + $0x20] sm:$0xff] %v216
                  %v218 = vld [vmem:[%s206 + $0x50] sm:$0xff]
                  %219 = vst [vmem:[%s207 + $0x28] sm:$0xff] %v218
                  %v220 = vld [vmem:[%s206 + $0x60] sm:$0xff]
                  %221 = vst [vmem:[%s207 + $0x30] sm:$0xff] %v220
                  %v222 = vld [vmem:[%s206 + $0x70] sm:$0xff]
                  %223 = vst [vmem:[%s207 + $0x38] sm:$0xff] %v222
                  %v224 = vld [vmem:[%s206 + $0x80] sm:$0xff]
                  %225 = vst [vmem:[%s207 + $0x40] sm:$0xff] %v224
                  %v226 = vld [vmem:[%s206 + $0x90] sm:$0xff]
                  %227 = vst [vmem:[%s207 + $0x48] sm:$0xff] %v226
                  %v228 = vld [vmem:[%s206 + $0xa0] sm:$0xff]
                  %229 = vst [vmem:[%s207 + $0x50] sm:$0xff] %v228
                  %v230 = vld [vmem:[%s206 + $0xb0] sm:$0xff]
                  %231 = vst [vmem:[%s207 + $0x58] sm:$0xff] %v230
                  %v232 = vld [vmem:[%s206 + $0xc0] sm:$0xff]
                  %233 = vst [vmem:[%s207 + $0x60] sm:$0xff] %v232
                  %v234 = vld [vmem:[%s206 + $0xd0] sm:$0xff]
                  %235 = vst [vmem:[%s207 + $0x68] sm:$0xff] %v234
                  %v236 = vld [vmem:[%s206 + $0xe0] sm:$0xff]
                  %237 = vst [vmem:[%s207 + $0x70] sm:$0xff] %v236
                  %v238 = vld [vmem:[%s206 + $0xf0] sm:$0xff]
                  %239 = vst [vmem:[%s207 + $0x78] sm:$0xff] %v238
                $region56: #{tpu_custom_call.1} parent=50 // loop_footer
                  %s205 = sadd.s32 1, %s201
                $region57: #{tpu_custom_call.1} parent=50 // loop_footer_branch
                  %200 = sbr.rel target = $region53
                $region58: #{tpu_custom_call.1} parent=50 // loop_exit
                  _
              $region51: #{tpu_custom_call.1} parent=35 // pred_fallthru
                _
              // Predicated region
              $region59: #{tpu_custom_call.1} parent=35 // pred_check
                _
              $region60: #{tpu_custom_call.1} parent=35 // pred_check_branch
                %241 = sbr.rel target = $region62
              $region61: #{tpu_custom_call.1} parent=35 // pred_region
                _
              $region62: #{tpu_custom_call.1} parent=35 // pred_fallthru
                _
            $region36: #{tpu_custom_call.1} parent=31 // pred_fallthru
              _
            // Predicated region
            $region37: #{tpu_custom_call.1} parent=31 // pred_check
              _
            $region38: #{tpu_custom_call.1} parent=31 // pred_check_branch
              %156 = sbr.rel target = $region40
            $region39: #{tpu_custom_call.1} parent=31 // pred_region
              loop: start=0, step=1, limit=1
              $region41: #{tpu_custom_call.1} parent=39 // loop_pre_header
                _
              $region42: #{tpu_custom_call.1} parent=39 // loop_header
                %s159 = sphi 0, %s163
                %p160 = scmp.ge.s32.totalorder %s159, 1
                %s164 = sphi %s150, %s150
                %s165 = sphi %s148, %s148
              $region43: #{tpu_custom_call.1} parent=39 // loop_header_branch
                %162 = sbr.rel (%p160) target = $region47
              $region44: #{tpu_custom_call.1} parent=39 // loop_body
                %v166 = vld [vmem:[%s164] sm:$0xff]
                %167 = vst [vmem:[%s165] sm:$0xff] %v166
                %v168 = vld [vmem:[%s164 + $0x10] sm:$0xff]
                %169 = vst [vmem:[%s165 + $0x8] sm:$0xff] %v168
                %v170 = vld [vmem:[%s164 + $0x20] sm:$0xff]
                %171 = vst [vmem:[%s165 + $0x10] sm:$0xff] %v170
                %v172 = vld [vmem:[%s164 + $0x30] sm:$0xff]
                %173 = vst [vmem:[%s165 + $0x18] sm:$0xff] %v172
                %v174 = vld [vmem:[%s164 + $0x40] sm:$0xff]
                %175 = vst [vmem:[%s165 + $0x20] sm:$0xff] %v174
                %v176 = vld [vmem:[%s164 + $0x50] sm:$0xff]
                %177 = vst [vmem:[%s165 + $0x28] sm:$0xff] %v176
                %v178 = vld [vmem:[%s164 + $0x60] sm:$0xff]
                %179 = vst [vmem:[%s165 + $0x30] sm:$0xff] %v178
                %v180 = vld [vmem:[%s164 + $0x70] sm:$0xff]
                %181 = vst [vmem:[%s165 + $0x38] sm:$0xff] %v180
                %v182 = vld [vmem:[%s164 + $0x80] sm:$0xff]
                %183 = vst [vmem:[%s165 + $0x40] sm:$0xff] %v182
                %v184 = vld [vmem:[%s164 + $0x90] sm:$0xff]
                %185 = vst [vmem:[%s165 + $0x48] sm:$0xff] %v184
                %v186 = vld [vmem:[%s164 + $0xa0] sm:$0xff]
                %187 = vst [vmem:[%s165 + $0x50] sm:$0xff] %v186
                %v188 = vld [vmem:[%s164 + $0xb0] sm:$0xff]
                %189 = vst [vmem:[%s165 + $0x58] sm:$0xff] %v188
                %v190 = vld [vmem:[%s164 + $0xc0] sm:$0xff]
                %191 = vst [vmem:[%s165 + $0x60] sm:$0xff] %v190
                %v192 = vld [vmem:[%s164 + $0xd0] sm:$0xff]
                %193 = vst [vmem:[%s165 + $0x68] sm:$0xff] %v192
                %v194 = vld [vmem:[%s164 + $0xe0] sm:$0xff]
                %195 = vst [vmem:[%s165 + $0x70] sm:$0xff] %v194
                %v196 = vld [vmem:[%s164 + $0xf0] sm:$0xff]
                %197 = vst [vmem:[%s165 + $0x78] sm:$0xff] %v196
              $region45: #{tpu_custom_call.1} parent=39 // loop_footer
                %s163 = sadd.s32 1, %s159
              $region46: #{tpu_custom_call.1} parent=39 // loop_footer_branch
                %158 = sbr.rel target = $region42
              $region47: #{tpu_custom_call.1} parent=39 // loop_exit
                _
            $region40: #{tpu_custom_call.1} parent=31 // pred_fallthru
              _
          $region32: #{tpu_custom_call.1} parent=27 // pred_fallthru
            _
          %242 = vnop
        $region28: #{tpu_custom_call.1} parent=23 // pred_fallthru
          _
      $region24: #{tpu_custom_call.1} parent=5 // pred_fallthru
        _
      %p243 = scmp.le.s32.totalorder 1, %s13
      %p244 = scmp.lt.s32.totalorder %s13, 3
      %p245 = pnand %p243, %p244
      %p246 = pneg %p245
      // Predicated region
      $region63: #{tpu_custom_call.1} parent=5 // pred_check
        _
      $region64: #{tpu_custom_call.1} parent=5 // pred_check_branch
        %248 = sbr.rel (%p245) target = $region66
      $region65: #{tpu_custom_call.1} parent=5 // pred_region
        %s249 = ssub.s32 %s13, 1
        // Predicated region
        $region67: #{tpu_custom_call.1} parent=65 // pred_check
          %p250 = pneg %p34
        $region68: #{tpu_custom_call.1} parent=65 // pred_check_branch
          %252 = sbr.rel (%p250) target = $region70
        $region69: #{tpu_custom_call.1} parent=65 // pred_region
          %253 = dma.done [#allocation3], 2048
        $region70: #{tpu_custom_call.1} parent=65 // pred_fallthru
          _
        %s254 = sand.u32 %s68, 1
        %s255 = sand.u32 %s68, 1
        %s256 = smul.addr %s255, 128
        %s257 = scalar_lea.vmem [#allocation5], %s256
        // Predicated region
        $region71: #{tpu_custom_call.1} parent=65 // pred_check
          %p258 = pneg %p81
        $region72: #{tpu_custom_call.1} parent=65 // pred_check_branch
          %260 = sbr.rel (%p258) target = $region74
        $region73: #{tpu_custom_call.1} parent=65 // pred_region
          _
        $region74: #{tpu_custom_call.1} parent=65 // pred_fallthru
          _
        %p261 = pneg %p34
        %p262 = pneg %p31
        %p263 = pneg %p55
        %p264 = pneg %p52
        %s265 = sand.u32 %s68, 1
        %s266 = sand.u32 %s68, 1
        %s267 = smul.addr %s266, 128
        %s268 = scalar_lea.vmem [#allocation5], %s267
        %p269 = pneg %p81
        %p270 = pneg %p78
        %p271 = pneg %p107
        %p272 = pneg %p104
        %s273 = sand.u32 %s94, 1
        %s274 = scalar_lea.sflag [#allocation4], %s273
        %s275 = sand.u32 %s94, 1
        %s276 = smul.addr %s275, 128
        %s277 = scalar_lea.vmem [#allocation6], %s276
        %v279 = vld [vmem:[%s257] sm:$0xff]
        %v280 = vld [vmem:[%s257 + $0x8] sm:$0xff]
        %v281 = vld [vmem:[%s257 + $0x10] sm:$0xff]
        %v282 = vld [vmem:[%s257 + $0x18] sm:$0xff]
        %v283 = vld [vmem:[%s257 + $0x20] sm:$0xff]
        %v284 = vld [vmem:[%s257 + $0x28] sm:$0xff]
        %v285 = vld [vmem:[%s257 + $0x30] sm:$0xff]
        %v286 = vld [vmem:[%s257 + $0x38] sm:$0xff]
        %v287 = vld [vmem:[%s257 + $0x40] sm:$0xff]
        %v288 = vld [vmem:[%s257 + $0x48] sm:$0xff]
        %v289 = vld [vmem:[%s257 + $0x50] sm:$0xff]
        %v290 = vld [vmem:[%s257 + $0x58] sm:$0xff]
        %v291 = vld [vmem:[%s257 + $0x60] sm:$0xff]
        %v292 = vld [vmem:[%s257 + $0x68] sm:$0xff]
        %v293 = vld [vmem:[%s257 + $0x70] sm:$0xff]
        %v294 = vld [vmem:[%s257 + $0x78] sm:$0xff]
        %v295 = vld [vmem:[#allocation2] sm:$0xf]
        %v296 = vld [vmem:[#allocation2 + $0x4] sm:$0xf]
        %v297 = vld [vmem:[#allocation2 + $0x8] sm:$0xf]
        %v298 = vld [vmem:[#allocation2 + $0xc] sm:$0xf]
        %v299 = vld [vmem:[#allocation2 + $0x10] sm:$0xf]
        %v300 = vld [vmem:[#allocation2 + $0x14] sm:$0xf]
        %v301 = vld [vmem:[#allocation2 + $0x18] sm:$0xf]
        %v302 = vld [vmem:[#allocation2 + $0x1c] sm:$0xf]
        %v303 = vld [vmem:[#allocation2 + $0x20] sm:$0xf]
        %v304 = vld [vmem:[#allocation2 + $0x24] sm:$0xf]
        %v305 = vld [vmem:[#allocation2 + $0x28] sm:$0xf]
        %v306 = vld [vmem:[#allocation2 + $0x2c] sm:$0xf]
        %v307 = vld [vmem:[#allocation2 + $0x30] sm:$0xf]
        %v308 = vld [vmem:[#allocation2 + $0x34] sm:$0xf]
        %v309 = vld [vmem:[#allocation2 + $0x38] sm:$0xf]
        %v310 = vld [vmem:[#allocation2 + $0x3c] sm:$0xf]
        %v311 = vpack.c.bf16 %v280, %v279
        %v312 = vpack.c.bf16 %v282, %v281
        %v313 = vpack.c.bf16 %v284, %v283
        %v314 = vpack.c.bf16 %v286, %v285
        %v315 = vpack.c.bf16 %v288, %v287
        %v316 = vpack.c.bf16 %v290, %v289
        %v317 = vpack.c.bf16 %v292, %v291
        %v318 = vpack.c.bf16 %v294, %v293
        %v319 = vld [vmem:[%s1] sm:$0xff]
        %v320 = vld [vmem:[%s1 + $0x8] sm:$0xff]
        %v321 = vld [vmem:[%s1 + $0x10] sm:$0xff]
        %v322 = vld [vmem:[%s1 + $0x18] sm:$0xff]
        %v323 = vld [vmem:[%s1 + $0x20] sm:$0xff]
        %v324 = vld [vmem:[%s1 + $0x28] sm:$0xff]
        %v325 = vld [vmem:[%s1 + $0x30] sm:$0xff]
        %v326 = vld [vmem:[%s1 + $0x38] sm:$0xff]
        %v327 = vld [vmem:[%s1 + $0x40] sm:$0xff]
        %v328 = vld [vmem:[%s1 + $0x48] sm:$0xff]
        %v329 = vld [vmem:[%s1 + $0x50] sm:$0xff]
        %v330 = vld [vmem:[%s1 + $0x58] sm:$0xff]
        %v331 = vld [vmem:[%s1 + $0x60] sm:$0xff]
        %v332 = vld [vmem:[%s1 + $0x68] sm:$0xff]
        %v333 = vld [vmem:[%s1 + $0x70] sm:$0xff]
        %v334 = vld [vmem:[%s1 + $0x78] sm:$0xff]
        %336 = vset.pattern.permute.xlu0 0
        %337 = vperm.xlu0 %336, %v319
        %v338 = vpop.permute.xlu0 %337
        %341 = vset.pattern.permute.xlu0 0
        %342 = vperm.xlu0 %341, %v320
        %v343 = vpop.permute.xlu0 %342
        %346 = vset.pattern.permute.xlu0 0
        %347 = vperm.xlu0 %346, %v321
        %v348 = vpop.permute.xlu0 %347
        %351 = vset.pattern.permute.xlu0 0
        %352 = vperm.xlu0 %351, %v322
        %v353 = vpop.permute.xlu0 %352
        %356 = vset.pattern.permute.xlu0 0
        %357 = vperm.xlu0 %356, %v323
        %v358 = vpop.permute.xlu0 %357
        %361 = vset.pattern.permute.xlu0 0
        %362 = vperm.xlu0 %361, %v324
        %v363 = vpop.permute.xlu0 %362
        %366 = vset.pattern.permute.xlu0 0
        %367 = vperm.xlu0 %366, %v325
        %v368 = vpop.permute.xlu0 %367
        %371 = vset.pattern.permute.xlu0 0
        %372 = vperm.xlu0 %371, %v326
        %v373 = vpop.permute.xlu0 %372
        %376 = vset.pattern.permute.xlu0 0
        %377 = vperm.xlu0 %376, %v327
        %v378 = vpop.permute.xlu0 %377
        %381 = vset.pattern.permute.xlu0 0
        %382 = vperm.xlu0 %381, %v328
        %v383 = vpop.permute.xlu0 %382
        %386 = vset.pattern.permute.xlu0 0
        %387 = vperm.xlu0 %386, %v329
        %v388 = vpop.permute.xlu0 %387
        %391 = vset.pattern.permute.xlu0 0
        %392 = vperm.xlu0 %391, %v330
        %v393 = vpop.permute.xlu0 %392
        %396 = vset.pattern.permute.xlu0 0
        %397 = vperm.xlu0 %396, %v331
        %v398 = vpop.permute.xlu0 %397
        %401 = vset.pattern.permute.xlu0 0
        %402 = vperm.xlu0 %401, %v332
        %v403 = vpop.permute.xlu0 %402
        %406 = vset.pattern.permute.xlu0 0
        %407 = vperm.xlu0 %406, %v333
        %v408 = vpop.permute.xlu0 %407
        %411 = vset.pattern.permute.xlu0 0
        %412 = vperm.xlu0 %411, %v334
        %v413 = vpop.permute.xlu0 %412
        %v431 = vunpack.c.l.b16 %v295
        %v432 = vunpack.c.l.b16 %v296
        %v433 = vunpack.c.l.b16 %v297
        %v434 = vunpack.c.l.b16 %v298
        %v435 = vunpack.c.l.b16 %v299
        %v436 = vunpack.c.l.b16 %v300
        %v437 = vunpack.c.l.b16 %v301
        %v438 = vunpack.c.l.b16 %v302
        %v439 = vunpack.c.l.b16 %v303
        %v440 = vunpack.c.l.b16 %v304
        %v441 = vunpack.c.l.b16 %v305
        %v442 = vunpack.c.l.b16 %v306
        %v443 = vunpack.c.l.b16 %v307
        %v444 = vunpack.c.l.b16 %v308
        %v445 = vunpack.c.l.b16 %v309
        %v446 = vunpack.c.l.b16 %v310
        %v447 = vpack.c.b16 %v432, %v431
        %v448 = vpack.c.b16 %v434, %v433
        %v449 = vpack.c.b16 %v436, %v435
        %v450 = vpack.c.b16 %v438, %v437
        %v451 = vpack.c.b16 %v440, %v439
        %v452 = vpack.c.b16 %v442, %v441
        %v453 = vpack.c.b16 %v444, %v443
        %v454 = vpack.c.b16 %v446, %v445
        %463 = vmatprep.subr.bf16.mxu0 0
        %464 = vmatpush1.bf16.msra.mxu0 %v311
        %465 = vmatprep.subr.bf16.mxu0 0
        %466 = vmatpush1.bf16.msra.mxu0 %v312
        %467 = vmatprep.subr.bf16.mxu0 0
        %468 = vmatpush1.bf16.msra.mxu0 %v313
        %469 = vmatprep.subr.bf16.mxu0 0
        %470 = vmatpush1.bf16.msra.mxu0 %v314
        %471 = vmatprep.subr.bf16.mxu0 0
        %472 = vmatpush1.bf16.msra.mxu0 %v315
        %473 = vmatprep.subr.bf16.mxu0 0
        %474 = vmatpush1.bf16.msra.mxu0 %v316
        %475 = vmatprep.subr.bf16.mxu0 0
        %476 = vmatpush1.bf16.msra.mxu0 %v317
        %477 = vmatprep.subr.bf16.mxu0 0
        %478 = vmatpush1.bf16.msra.mxu0 %v318
        %479 = vmatprep.subr.bf16.mxu0 0
        %480 = vmatpush1.bf16.msra.mxu0 0
        %481 = vmatprep.subr.bf16.mxu0 0
        %482 = vmatpush1.bf16.msra.mxu0 0
        %483 = vmatprep.subr.bf16.mxu0 0
        %484 = vmatpush1.bf16.msra.mxu0 0
        %485 = vmatprep.subr.bf16.mxu0 0
        %486 = vmatpush1.bf16.msra.mxu0 0
        %487 = vmatprep.subr.bf16.mxu0 0
        %488 = vmatpush1.bf16.msra.mxu0 0
        %489 = vmatprep.subr.bf16.mxu0 0
        %490 = vmatpush1.bf16.msra.mxu0 0
        %491 = vmatprep.subr.bf16.mxu0 0
        %492 = vmatpush1.bf16.msra.mxu0 0
        %493 = vmatprep.subr.bf16.mxu0 0
        %494 = vmatpush1.bf16.msra.mxu0 0
        %495 = vmatprep.mubr.bf16.mxu0 0
        %496 = vmatmul.mubr.bf16.gmra.mrb[0].mxu0 %v447
        %v497 = vpop.f32.mrb[0].mxu0
        %v498 = vadd.f32 %v338, %v497
        %v499 = vpop.f32.mrb[0].mxu0
        %v500 = vpop.f32.mrb[0].mxu0
        %v501 = vadd.f32 %v343, %v500
        %v502 = vpop.f32.mrb[0].mxu0
        %503 = vmatprep.mubr.bf16.mxu0 0
        %504 = vmatmul.mubr.bf16.gmra.mrb[0].mxu0 %v448
        %v505 = vpop.f32.mrb[0].mxu0
        %v506 = vadd.f32 %v348, %v505
        %v507 = vpop.f32.mrb[0].mxu0
        %v508 = vpop.f32.mrb[0].mxu0
        %v509 = vadd.f32 %v353, %v508
        %v510 = vpop.f32.mrb[0].mxu0
        %511 = vmatprep.mubr.bf16.mxu0 0
        %512 = vmatmul.mubr.bf16.gmra.mrb[0].mxu0 %v449
        %v513 = vpop.f32.mrb[0].mxu0
        %v514 = vadd.f32 %v358, %v513
        %v515 = vpop.f32.mrb[0].mxu0
        %v516 = vpop.f32.mrb[0].mxu0
        %v517 = vadd.f32 %v363, %v516
        %v518 = vpop.f32.mrb[0].mxu0
        %519 = vmatprep.mubr.bf16.mxu0 0
        %520 = vmatmul.mubr.bf16.gmra.mrb[0].mxu0 %v450
        %v521 = vpop.f32.mrb[0].mxu0
        %v522 = vadd.f32 %v368, %v521
        %v523 = vpop.f32.mrb[0].mxu0
        %v524 = vpop.f32.mrb[0].mxu0
        %v525 = vadd.f32 %v373, %v524
        %v526 = vpop.f32.mrb[0].mxu0
        %527 = vmatprep.mubr.bf16.mxu0 0
        %528 = vmatmul.mubr.bf16.gmra.mrb[0].mxu0 %v451
        %v529 = vpop.f32.mrb[0].mxu0
        %v530 = vadd.f32 %v378, %v529
        %v531 = vpop.f32.mrb[0].mxu0
        %v532 = vpop.f32.mrb[0].mxu0
        %v533 = vadd.f32 %v383, %v532
        %v534 = vpop.f32.mrb[0].mxu0
        %535 = vmatprep.mubr.bf16.mxu0 0
        %536 = vmatmul.mubr.bf16.gmra.mrb[0].mxu0 %v452
        %v537 = vpop.f32.mrb[0].mxu0
        %v538 = vadd.f32 %v388, %v537
        %v539 = vpop.f32.mrb[0].mxu0
        %v540 = vpop.f32.mrb[0].mxu0
        %v541 = vadd.f32 %v393, %v540
        %v542 = vpop.f32.mrb[0].mxu0
        %543 = vmatprep.mubr.bf16.mxu0 0
        %544 = vmatmul.mubr.bf16.gmra.mrb[0].mxu0 %v453
        %v545 = vpop.f32.mrb[0].mxu0
        %v546 = vadd.f32 %v398, %v545
        %v547 = vpop.f32.mrb[0].mxu0
        %v548 = vpop.f32.mrb[0].mxu0
        %v549 = vadd.f32 %v403, %v548
        %v550 = vpop.f32.mrb[0].mxu0
        %551 = vmatprep.mubr.bf16.mxu0 0
        %552 = vmatmul.mubr.bf16.gmra.mrb[0].mxu0 %v454
        %v553 = vpop.f32.mrb[0].mxu0
        %v554 = vadd.f32 %v408, %v553
        %v555 = vpop.f32.mrb[0].mxu0
        %v556 = vpop.f32.mrb[0].mxu0
        %v557 = vadd.f32 %v413, %v556
        %v558 = vpop.f32.mrb[0].mxu0
        %559 = vdwg.mxu0
        %v560 = vadd.f32 %v498, %v279
        %v561 = vadd.f32 %v501, %v280
        %v562 = vadd.f32 %v506, %v281
        %v563 = vadd.f32 %v509, %v282
        %v564 = vadd.f32 %v514, %v283
        %v565 = vadd.f32 %v517, %v284
        %v566 = vadd.f32 %v522, %v285
        %v567 = vadd.f32 %v525, %v286
        %v568 = vadd.f32 %v530, %v287
        %v569 = vadd.f32 %v533, %v288
        %v570 = vadd.f32 %v538, %v289
        %v571 = vadd.f32 %v541, %v290
        %v572 = vadd.f32 %v546, %v291
        %v573 = vadd.f32 %v549, %v292
        %v574 = vadd.f32 %v554, %v293
        %v575 = vadd.f32 %v557, %v294
        %s576 = scalar_lea.vmem [#allocation2], 64
        %v577 = vld [vmem:[%s576] sm:$0xf]
        %v578 = vld [vmem:[%s576 + $0x4] sm:$0xf]
        %v579 = vld [vmem:[%s576 + $0x8] sm:$0xf]
        %v580 = vld [vmem:[%s576 + $0xc] sm:$0xf]
        %v581 = vld [vmem:[%s576 + $0x10] sm:$0xf]
        %v582 = vld [vmem:[%s576 + $0x14] sm:$0xf]
        %v583 = vld [vmem:[%s576 + $0x18] sm:$0xf]
        %v584 = vld [vmem:[%s576 + $0x1c] sm:$0xf]
        %v585 = vld [vmem:[%s576 + $0x20] sm:$0xf]
        %v586 = vld [vmem:[%s576 + $0x24] sm:$0xf]
        %v587 = vld [vmem:[%s576 + $0x28] sm:$0xf]
        %v588 = vld [vmem:[%s576 + $0x2c] sm:$0xf]
        %v589 = vld [vmem:[%s576 + $0x30] sm:$0xf]
        %v590 = vld [vmem:[%s576 + $0x34] sm:$0xf]
        %v591 = vld [vmem:[%s576 + $0x38] sm:$0xf]
        %v592 = vld [vmem:[%s576 + $0x3c] sm:$0xf]
        %v593 = vpack.c.bf16 %v561, %v560
        %v594 = vpack.c.bf16 %v563, %v562
        %v595 = vpack.c.bf16 %v565, %v564
        %v596 = vpack.c.bf16 %v567, %v566
        %v597 = vpack.c.bf16 %v569, %v568
        %v598 = vpack.c.bf16 %v571, %v570
        %v599 = vpack.c.bf16 %v573, %v572
        %v600 = vpack.c.bf16 %v575, %v574
        %s601 = scalar_lea.vmem %s1, 128
        %v602 = vld [vmem:[%s601] sm:$0xff]
        %v603 = vld [vmem:[%s601 + $0x8] sm:$0xff]
        %v604 = vld [vmem:[%s601 + $0x10] sm:$0xff]
        %v605 = vld [vmem:[%s601 + $0x18] sm:$0xff]
        %v606 = vld [vmem:[%s601 + $0x20] sm:$0xff]
        %v607 = vld [vmem:[%s601 + $0x28] sm:$0xff]
        %v608 = vld [vmem:[%s601 + $0x30] sm:$0xff]
        %v609 = vld [vmem:[%s601 + $0x38] sm:$0xff]
        %v610 = vld [vmem:[%s601 + $0x40] sm:$0xff]
        %v611 = vld [vmem:[%s601 + $0x48] sm:$0xff]
        %v612 = vld [vmem:[%s601 + $0x50] sm:$0xff]
        %v613 = vld [vmem:[%s601 + $0x58] sm:$0xff]
        %v614 = vld [vmem:[%s601 + $0x60] sm:$0xff]
        %v615 = vld [vmem:[%s601 + $0x68] sm:$0xff]
        %v616 = vld [vmem:[%s601 + $0x70] sm:$0xff]
        %v617 = vld [vmem:[%s601 + $0x78] sm:$0xff]
        %619 = vset.pattern.permute.xlu0 0
        %620 = vperm.xlu0 %619, %v602
        %v621 = vpop.permute.xlu0 %620
        %624 = vset.pattern.permute.xlu0 0
        %625 = vperm.xlu0 %624, %v603
        %v626 = vpop.permute.xlu0 %625
        %629 = vset.pattern.permute.xlu0 0
        %630 = vperm.xlu0 %629, %v604
        %v631 = vpop.permute.xlu0 %630
        %634 = vset.pattern.permute.xlu0 0
        %635 = vperm.xlu0 %634, %v605
        %v636 = vpop.permute.xlu0 %635
        %639 = vset.pattern.permute.xlu0 0
        %640 = vperm.xlu0 %639, %v606
        %v641 = vpop.permute.xlu0 %640
        %644 = vset.pattern.permute.xlu0 0
        %645 = vperm.xlu0 %644, %v607
        %v646 = vpop.permute.xlu0 %645
        %649 = vset.pattern.permute.xlu0 0
        %650 = vperm.xlu0 %649, %v608
        %v651 = vpop.permute.xlu0 %650
        %654 = vset.pattern.permute.xlu0 0
        %655 = vperm.xlu0 %654, %v609
        %v656 = vpop.permute.xlu0 %655
        %659 = vset.pattern.permute.xlu0 0
        %660 = vperm.xlu0 %659, %v610
        %v661 = vpop.permute.xlu0 %660
        %664 = vset.pattern.permute.xlu0 0
        %665 = vperm.xlu0 %664, %v611
        %v666 = vpop.permute.xlu0 %665
        %669 = vset.pattern.permute.xlu0 0
        %670 = vperm.xlu0 %669, %v612
        %v671 = vpop.permute.xlu0 %670
        %674 = vset.pattern.permute.xlu0 0
        %675 = vperm.xlu0 %674, %v613
        %v676 = vpop.permute.xlu0 %675
        %679 = vset.pattern.permute.xlu0 0
        %680 = vperm.xlu0 %679, %v614
        %v681 = vpop.permute.xlu0 %680
        %684 = vset.pattern.permute.xlu0 0
        %685 = vperm.xlu0 %684, %v615
        %v686 = vpop.permute.xlu0 %685
        %689 = vset.pattern.permute.xlu0 0
        %690 = vperm.xlu0 %689, %v616
        %v691 = vpop.permute.xlu0 %690
        %694 = vset.pattern.permute.xlu0 0
        %695 = vperm.xlu0 %694, %v617
        %v696 = vpop.permute.xlu0 %695
        %v714 = vunpack.c.l.b16 %v577
        %v715 = vunpack.c.l.b16 %v578
        %v716 = vunpack.c.l.b16 %v579
        %v717 = vunpack.c.l.b16 %v580
        %v718 = vunpack.c.l.b16 %v581
        %v719 = vunpack.c.l.b16 %v582
        %v720 = vunpack.c.l.b16 %v583
        %v721 = vunpack.c.l.b16 %v584
        %v722 = vunpack.c.l.b16 %v585
        %v723 = vunpack.c.l.b16 %v586
        %v724 = vunpack.c.l.b16 %v587
        %v725 = vunpack.c.l.b16 %v588
        %v726 = vunpack.c.l.b16 %v589
        %v727 = vunpack.c.l.b16 %v590
        %v728 = vunpack.c.l.b16 %v591
        %v729 = vunpack.c.l.b16 %v592
        %v730 = vpack.c.b16 %v715, %v714
        %v731 = vpack.c.b16 %v717, %v716
        %v732 = vpack.c.b16 %v719, %v718
        %v733 = vpack.c.b16 %v721, %v720
        %v734 = vpack.c.b16 %v723, %v722
        %v735 = vpack.c.b16 %v725, %v724
        %v736 = vpack.c.b16 %v727, %v726
        %v737 = vpack.c.b16 %v729, %v728
        %746 = vmatprep.subr.bf16.mxu0 0
        %747 = vmatpush1.bf16.msra.mxu0 %v593
        %748 = vmatprep.subr.bf16.mxu0 0
        %749 = vmatpush1.bf16.msra.mxu0 %v594
        %750 = vmatprep.subr.bf16.mxu0 0
        %751 = vmatpush1.bf16.msra.mxu0 %v595
        %752 = vmatprep.subr.bf16.mxu0 0
        %753 = vmatpush1.bf16.msra.mxu0 %v596
        %754 = vmatprep.subr.bf16.mxu0 0
        %755 = vmatpush1.bf16.msra.mxu0 %v597
        %756 = vmatprep.subr.bf16.mxu0 0
        %757 = vmatpush1.bf16.msra.mxu0 %v598
        %758 = vmatprep.subr.bf16.mxu0 0
        %759 = vmatpush1.bf16.msra.mxu0 %v599
        %760 = vmatprep.subr.bf16.mxu0 0
        %761 = vmatpush1.bf16.msra.mxu0 %v600
        %762 = vmatprep.subr.bf16.mxu0 0
        %763 = vmatpush1.bf16.msra.mxu0 0
        %764 = vmatprep.subr.bf16.mxu0 0
        %765 = vmatpush1.bf16.msra.mxu0 0
        %766 = vmatprep.subr.bf16.mxu0 0
        %767 = vmatpush1.bf16.msra.mxu0 0
        %768 = vmatprep.subr.bf16.mxu0 0
        %769 = vmatpush1.bf16.msra.mxu0 0
        %770 = vmatprep.subr.bf16.mxu0 0
        %771 = vmatpush1.bf16.msra.mxu0 0
        %772 = vmatprep.subr.bf16.mxu0 0
        %773 = vmatpush1.bf16.msra.mxu0 0
        %774 = vmatprep.subr.bf16.mxu0 0
        %775 = vmatpush1.bf16.msra.mxu0 0
        %776 = vmatprep.subr.bf16.mxu0 0
        %777 = vmatpush1.bf16.msra.mxu0 0
        %778 = vmatprep.mubr.bf16.mxu0 0
        %779 = vmatmul.mubr.bf16.gmra.mrb[0].mxu0 %v730
        %v780 = vpop.f32.mrb[0].mxu0
        %v781 = vadd.f32 %v621, %v780
        %v782 = vpop.f32.mrb[0].mxu0
        %v783 = vpop.f32.mrb[0].mxu0
        %v784 = vadd.f32 %v626, %v783
        %v785 = vpop.f32.mrb[0].mxu0
        %786 = vmatprep.mubr.bf16.mxu0 0
        %787 = vmatmul.mubr.bf16.gmra.mrb[0].mxu0 %v731
        %v788 = vpop.f32.mrb[0].mxu0
        %v789 = vadd.f32 %v631, %v788
        %v790 = vpop.f32.mrb[0].mxu0
        %v791 = vpop.f32.mrb[0].mxu0
        %v792 = vadd.f32 %v636, %v791
        %v793 = vpop.f32.mrb[0].mxu0
        %794 = vmatprep.mubr.bf16.mxu0 0
        %795 = vmatmul.mubr.bf16.gmra.mrb[0].mxu0 %v732
        %v796 = vpop.f32.mrb[0].mxu0
        %v797 = vadd.f32 %v641, %v796
        %v798 = vpop.f32.mrb[0].mxu0
        %v799 = vpop.f32.mrb[0].mxu0
        %v800 = vadd.f32 %v646, %v799
        %v801 = vpop.f32.mrb[0].mxu0
        %802 = vmatprep.mubr.bf16.mxu0 0
        %803 = vmatmul.mubr.bf16.gmra.mrb[0].mxu0 %v733
        %v804 = vpop.f32.mrb[0].mxu0
        %v805 = vadd.f32 %v651, %v804
        %v806 = vpop.f32.mrb[0].mxu0
        %v807 = vpop.f32.mrb[0].mxu0
        %v808 = vadd.f32 %v656, %v807
        %v809 = vpop.f32.mrb[0].mxu0
        %810 = vmatprep.mubr.bf16.mxu0 0
        %811 = vmatmul.mubr.bf16.gmra.mrb[0].mxu0 %v734
        %v812 = vpop.f32.mrb[0].mxu0
        %v813 = vadd.f32 %v661, %v812
        %v814 = vpop.f32.mrb[0].mxu0
        %v815 = vpop.f32.mrb[0].mxu0
        %v816 = vadd.f32 %v666, %v815
        %v817 = vpop.f32.mrb[0].mxu0
        %818 = vmatprep.mubr.bf16.mxu0 0
        %819 = vmatmul.mubr.bf16.gmra.mrb[0].mxu0 %v735
        %v820 = vpop.f32.mrb[0].mxu0
        %v821 = vadd.f32 %v671, %v820
        %v822 = vpop.f32.mrb[0].mxu0
        %v823 = vpop.f32.mrb[0].mxu0
        %v824 = vadd.f32 %v676, %v823
        %v825 = vpop.f32.mrb[0].mxu0
        %826 = vmatprep.mubr.bf16.mxu0 0
        %827 = vmatmul.mubr.bf16.gmra.mrb[0].mxu0 %v736
        %v828 = vpop.f32.mrb[0].mxu0
        %v829 = vadd.f32 %v681, %v828
        %v830 = vpop.f32.mrb[0].mxu0
        %v831 = vpop.f32.mrb[0].mxu0
        %v832 = vadd.f32 %v686, %v831
        %v833 = vpop.f32.mrb[0].mxu0
        %834 = vmatprep.mubr.bf16.mxu0 0
        %835 = vmatmul.mubr.bf16.gmra.mrb[0].mxu0 %v737
        %v836 = vpop.f32.mrb[0].mxu0
        %v837 = vadd.f32 %v691, %v836
        %v838 = vpop.f32.mrb[0].mxu0
        %v839 = vpop.f32.mrb[0].mxu0
        %v840 = vadd.f32 %v696, %v839
        %v841 = vpop.f32.mrb[0].mxu0
        %842 = vdwg.mxu0
        %v843 = vadd.f32 %v781, %v560
        %v844 = vadd.f32 %v784, %v561
        %v845 = vadd.f32 %v789, %v562
        %v846 = vadd.f32 %v792, %v563
        %v847 = vadd.f32 %v797, %v564
        %v848 = vadd.f32 %v800, %v565
        %v849 = vadd.f32 %v805, %v566
        %v850 = vadd.f32 %v808, %v567
        %v851 = vadd.f32 %v813, %v568
        %v852 = vadd.f32 %v816, %v569
        %v853 = vadd.f32 %v821, %v570
        %v854 = vadd.f32 %v824, %v571
        %v855 = vadd.f32 %v829, %v572
        %v856 = vadd.f32 %v832, %v573
        %v857 = vadd.f32 %v837, %v574
        %v858 = vadd.f32 %v840, %v575
        %v859 = vmax.f32 %v843, 0.0
        %v860 = vmax.f32 %v844, 0.0
        %v861 = vmax.f32 %v845, 0.0
        %v862 = vmax.f32 %v846, 0.0
        %v863 = vmax.f32 %v847, 0.0
        %v864 = vmax.f32 %v848, 0.0
        %v865 = vmax.f32 %v849, 0.0
        %v866 = vmax.f32 %v850, 0.0
        %v867 = vmax.f32 %v851, 0.0
        %v868 = vmax.f32 %v852, 0.0
        %v869 = vmax.f32 %v853, 0.0
        %v870 = vmax.f32 %v854, 0.0
        %v871 = vmax.f32 %v855, 0.0
        %v872 = vmax.f32 %v856, 0.0
        %v873 = vmax.f32 %v857, 0.0
        %v874 = vmax.f32 %v858, 0.0
        %875 = vst [vmem:[%s277] sm:$0xff] %v859
        %876 = vst [vmem:[%s277 + $0x8] sm:$0xff] %v860
        %877 = vst [vmem:[%s277 + $0x10] sm:$0xff] %v861
        %878 = vst [vmem:[%s277 + $0x18] sm:$0xff] %v862
        %879 = vst [vmem:[%s277 + $0x20] sm:$0xff] %v863
        %880 = vst [vmem:[%s277 + $0x28] sm:$0xff] %v864
        %881 = vst [vmem:[%s277 + $0x30] sm:$0xff] %v865
        %882 = vst [vmem:[%s277 + $0x38] sm:$0xff] %v866
        %883 = vst [vmem:[%s277 + $0x40] sm:$0xff] %v867
        %884 = vst [vmem:[%s277 + $0x48] sm:$0xff] %v868
        %885 = vst [vmem:[%s277 + $0x50] sm:$0xff] %v869
        %886 = vst [vmem:[%s277 + $0x58] sm:$0xff] %v870
        %887 = vst [vmem:[%s277 + $0x60] sm:$0xff] %v871
        %888 = vst [vmem:[%s277 + $0x68] sm:$0xff] %v872
        %889 = vst [vmem:[%s277 + $0x70] sm:$0xff] %v873
        %890 = vst [vmem:[%s277 + $0x78] sm:$0xff] %v874
        %s891 = sand.u32 %s94, 1
        %s892 = scalar_lea.sflag [#allocation4], %s891
        %s893 = sand.u32 %s94, 1
        %s894 = smul.addr %s893, 128
        %s895 = scalar_lea.vmem [#allocation6], %s894
        // Predicated region
        $region75: #{tpu_custom_call.1} parent=65 // pred_check
          %p896 = pneg %p104
        $region76: #{tpu_custom_call.1} parent=65 // pred_check_branch
          %898 = sbr.rel (%p896) target = $region78
        $region77: #{tpu_custom_call.1} parent=65 // pred_region
          %s900 = ssub.s32 2048, 2048
          %901 = vsyncadd %s892, %s900
          %s902 = smul.addr %s18, 128
          %s903 = scalar_lea.hbm %s3, %s902
          %s904 = sshll.u32 %s895, 4
          %s905 = int_to_ptr.vmem [resolvable:$true] %s904
          %910 = dma.vmem_to_hbm [thread:$0]  %s905, 2048, %s903, %s892, 128, 256, 8
        $region78: #{tpu_custom_call.1} parent=65 // pred_fallthru
          _
      $region66: #{tpu_custom_call.1} parent=5 // pred_fallthru
        _
      %p911 = scmp.le.s32.totalorder 2, %s13
      // Predicated region
      $region79: #{tpu_custom_call.1} parent=5 // pred_check
        %p912 = pneg %p911
      $region80: #{tpu_custom_call.1} parent=5 // pred_check_branch
        %914 = sbr.rel (%p912) target = $region82
      $region81: #{tpu_custom_call.1} parent=5 // pred_region
        %s915 = ssub.s32 %s13, 2
        // Predicated region
        $region83: #{tpu_custom_call.1} parent=81 // pred_check
          %p916 = pneg %p110
        $region84: #{tpu_custom_call.1} parent=81 // pred_check_branch
          %918 = sbr.rel (%p916) target = $region86
        $region85: #{tpu_custom_call.1} parent=81 // pred_region
          %s919 = sand.u32 %s95, 1
          %s920 = scalar_lea.sflag [#allocation4], %s919
          %s921 = sand.u32 %s95, 1
          %s922 = smul.addr %s921, 128
          %s923 = scalar_lea.vmem [#allocation6], %s922
          %924 = dma.done %s920, 2048
        $region86: #{tpu_custom_call.1} parent=81 // pred_fallthru
          _
      $region82: #{tpu_custom_call.1} parent=5 // pred_fallthru
        _
    $region6: #{tpu_custom_call.1} parent=1 // loop_footer
      %s17 = sadd.s32 1, %s13
    $region7: #{tpu_custom_call.1} parent=1 // loop_footer_branch
      %12 = sbr.rel target = $region3
    $region8: #{tpu_custom_call.1} parent=1 // loop_exit
      _
    %925 = vsyncpa [#allocation3], 1
    %s926 = scalar_lea.sflag [#allocation3], 1
    %927 = vsyncpa %s926, 1
    %928 = vsyncpa [#allocation4], 1
    %s929 = scalar_lea.sflag [#allocation4], 1
    %930 = vsyncpa %s929, 1

</llo_original>
